<compile_context>
chip_gen: v5e
topology: v5e:2x2
jax: 0.10.0
libtpu: 0.0.40
codegen_flags: <defaults>
</compile_context>

<pallas_src>
import functools
from math import factorial, gcd

import numpy as np
import jax
import jax.numpy as jnp
from jax import lax
from jax.experimental import pallas as pl
from jax.experimental.pallas import tpu as pltpu


# ---------------------------------------------------------------------------
# Deterministic parameter construction (mirrors the PyTorch __init__ math).
# ---------------------------------------------------------------------------
def _round_up(x, m):
    return ((x + m - 1) // m) * m


def _calc_D(s):
    s = np.asarray(s, dtype=np.float64)
    s0__1 = s[1:-1] - s[:-2]
    s1_0 = s[2:] - s[1:-1]
    s1__1 = s[2:] - s[:-2]
    A = -(s1_0 / s1__1 / s0__1)
    B = -(s0__1 / s1__1 / s1_0) + s1_0 / s1__1 / s0__1
    C = s0__1 / s1__1 / s1_0
    N = s.shape[0]
    D = np.zeros((N, N), dtype=np.float64)
    r = np.arange(N)
    D[(r + 1)[:-2], r[:-2]] = A
    D[(r + 1)[:-2], (r + 1)[:-2]] = B
    D[(r + 1)[:-2], (r + 2)[:-2]] = C
    return D.T


def _calc_Linvk(s, k):
    D = _calc_D(s)
    Linvk = ((-1.0) ** k / factorial(k)
             * (np.linalg.matrix_power(D, k)
                @ np.diag(np.asarray(s, np.float64) ** (k + 1.0))))[:, k:-k]
    return Linvk.T  # (ntau, N)


def make_sith_params(in_features, tau_min=1.0, tau_max=50.0, k=4, alpha=1.0,
                     g=1.0, ntau=30, T_every=1, dur=1.0):
    c = (tau_max / tau_min) ** (1.0 / (ntau - 1)) - 1.0
    tau_star = tau_min * (1.0 + c) ** np.arange(-k, ntau + k, dtype=np.float64)  # (N,)
    s = k / tau_star                                                             # (N,)

    Linvk = _calc_Linvk(s, k)                 # (ntau, N)
    Linvk_sub = Linvk[::T_every, :]           # (ntau_sub, N)  fold T_every into the matrix
    tau_sub = tau_star[k:-k:T_every]          # (ntau_sub,)
    taug = tau_sub ** g                       # (ntau_sub,)

    e = np.exp(-s * alpha * dur)
    decay = e                                 # (N,)
    gain = (1.0 - e) / (s * alpha)            # (N,)

    # Host-side folding (fp64):  big_T = diag(taug) @ Linvk @ diag(gain) @ t'
    # with t' = t/gain and the recurrence  t'_b = decay * t'_{b-1} + x_b.
    linvk_folded = taug[:, None] * Linvk_sub * gain[None, :]   # (ntau_sub, N)

    N = s.shape[0]
    ntau_sub = Linvk_sub.shape[0]
    n_pad = _round_up(N, 8)
    ntau_pad = _round_up(ntau_sub, 8)

    F = in_features
    L = F * (128 // gcd(F, 128))              # lane-group width = lcm(F, 128)
    G = L // F                                # timesteps per 128-aligned lane group
    n_levels = (G - 1).bit_length()           # doubling-scan depth (ceil(log2(G)))

    linvk_p = np.zeros((ntau_pad, n_pad), np.float64)
    linvk_p[:ntau_sub, :N] = linvk_folded     # padded rows/cols are 0

    # Per-level scan weights: W[m, n, l] = decay_n**(2**m) for l >= 2**m*F, else 0.
    # (lane mask + decay power fused into one VPU operand; padded rows stay 0)
    scan_w = np.zeros((max(n_levels, 1), n_pad, L), np.float64)
    for m in range(n_levels):
        delta = (1 << m) * F
        scan_w[m, :N, delta:] = (decay ** (1 << m))[:, None]

    # Carry weights: C[n, l] = decay_n for l < F, else 0 (next group's injected carry).
    carry_w = np.zeros((n_pad, L), np.float64)
    carry_w[:N, :F] = decay[:, None]

    f32 = lambda a: jnp.asarray(a, dtype=jnp.float32)
    params = dict(linvk=f32(linvk_p), scan_w=f32(scan_w), carry_w=f32(carry_w),
                  ntau_sub=ntau_sub, n_pad=n_pad, ntau_pad=ntau_pad,
                  in_features=F, L=L, G=G, n_levels=n_levels)
    # Un-folded parameters for the pure-JAX reference (so folding is validated).
    ref_params = dict(decay=f32(decay), gain=f32(gain), linvk=f32(Linvk_sub),
                      taug=f32(taug), ntau_sub=ntau_sub)
    return params, ref_params


def _choose_block_steps(F, S, target_lanes=2048):
    """Timesteps per grid block: multiple of the 128-lane group size, with
    B*F >= target_lanes when the sequence is long enough (amortizes grid
    overhead and gives the MXU a long free dimension)."""
    G = 128 // gcd(F, 128)                 # steps per 128-aligned lane group
    b = G
    while b * F < target_lanes:
        b *= 2
    s_pad_groups = _round_up(max(S, 1), G)
    return max(G, min(b, s_pad_groups))


# ---------------------------------------------------------------------------
# Pallas kernel: one grid step = B timesteps, processed as B//G lane groups.
# Lanes are time-major: lane b*F + f  <->  timestep b, feature f.
# ---------------------------------------------------------------------------
def sith_kernel(inp_ref, w_ref, c_ref, linvk_ref, out_ref, t_ref, hist_ref,
                *, F, L, n_levels, n_groups, carry_shift):
    @pl.when(pl.program_id(0) == 0)
    def _init():
        # Fresh little-t each forward call (state is not carried across calls).
        t_ref[...] = jnp.zeros_like(t_ref)

    def group_body(g, t0):
        start = pl.multiple_of(g * L, L)
        # This group's G timesteps, time-major in lanes; broadcasts over n_pad rows.
        x = inp_ref[0, :, pl.ds(start, L)]                 # (1, L)
        # Carry (already decay-premultiplied, at lanes [0, F)) injected at step 0.
        y = t0 + x                                          # (n_pad, L)
        # Log-depth weighted inclusive prefix over the group's steps:
        #   y[:, j] <- sum_{i<=j} decay^(j-i) * y_init[:, i]
        for m in range(n_levels):
            delta = (1 << m) * F
            y = y + w_ref[m] * pltpu.roll(y, shift=delta, axis=1)
        # One unmasked, 128-aligned store of the whole group's little-t history.
        hist_ref[:, pl.ds(start, L)] = y
        # Next group's carry: decay * (last step's state), moved to lanes [0, F).
        if carry_shift:
            y = pltpu.roll(y, shift=carry_shift, axis=1)
        return c_ref[...] * y

    t_ref[...] = lax.fori_loop(0, n_groups, group_body, t_ref[...], unroll=True)

    # One inverse-Laplace matmul per block on the MXU (gain & tau**g pre-folded):
    # (ntau_pad, N_pad) @ (N_pad, B*F) -> lane-dense (ntau_pad, B*F) output block.
    out_ref[...] = jnp.dot(linvk_ref[...], hist_ref[...],
                           preferred_element_type=jnp.float32)


def sith_forward(inp, params, block_steps=None):
    """inp: (1, S, F) float32 -> (1, S, ntau_sub, F) float32."""
    assert inp.ndim == 3 and inp.shape[0] == 1
    _, S, F = inp.shape
    assert F == params["in_features"]
    ntau_pad, n_pad = params["linvk"].shape
    ntau_sub = params["ntau_sub"]
    L, G, n_levels = params["L"], params["G"], params["n_levels"]

    B = block_steps if block_steps is not None else _choose_block_steps(F, S)
    assert B % G == 0, (B, G)
    S_pad = _round_up(S, B)
    n_blocks = S_pad // B

    # Zero-pad the sequence and lay it out time-major in lanes, one row per block.
    x = jnp.zeros((S_pad * F,), jnp.float32).at[:S * F].set(
        inp[0].astype(jnp.float32).reshape(-1))
    x_blocks = x.reshape(n_blocks, 1, B * F)

    kernel = functools.partial(sith_kernel, F=F, L=L, n_levels=n_levels,
                               n_groups=B // G, carry_shift=F % L)

    out = pl.pallas_call(
        kernel,
        out_shape=jax.ShapeDtypeStruct((ntau_pad, S_pad * F), jnp.float32),
        grid=(n_blocks,),
        in_specs=[
            pl.BlockSpec((1, 1, B * F), lambda i: (i, 0, 0)),          # B timesteps
            pl.BlockSpec(params["scan_w"].shape, lambda i: (0, 0, 0)), # scan weights
            pl.BlockSpec((n_pad, L), lambda i: (0, 0)),                # carry weights
            pl.BlockSpec((ntau_pad, n_pad), lambda i: (0, 0)),         # folded Linvk
        ],
        out_specs=pl.BlockSpec((ntau_pad, B * F), lambda i: (0, i)),   # lane-dense block
        scratch_shapes=[
            pltpu.VMEM((n_pad, L), jnp.float32),        # little-t carry (across blocks)
            pltpu.VMEM((n_pad, B * F), jnp.float32),    # per-block little-t history
        ],
        compiler_params=pltpu.CompilerParams(dimension_semantics=("arbitrary",)),
    )(x_blocks, params["scan_w"], params["carry_w"], params["linvk"])

    out = out[:ntau_sub]                                  # drop tau padding
    out = out.reshape(ntau_sub, S_pad, F)[:, :S]          # drop time padding
    out = jnp.transpose(out, (1, 0, 2))                   # (S, ntau_sub, F)
    return out[None]                                      # (1, S, ntau_sub, F)


# ---------------------------------------------------------------------------
# Plain-JAX reference using the UN-folded parameters (validates the folding).
# ---------------------------------------------------------------------------
def sith_reference(inp, ref_params):
    decay = ref_params["decay"][:, None]
    gain = ref_params["gain"][:, None]
    linvk = ref_params["linvk"]
    taug = ref_params["taug"][:, None]
    N = decay.shape[0]
    F = inp.shape[-1]

    def step(t, f):
        t = t * decay + f[None, :] * gain
        big_t = jnp.dot(linvk, t, precision=lax.Precision.HIGHEST) * taug
        return t, big_t

    _, outs = lax.scan(step, jnp.zeros((N, F), jnp.float32),
                       inp[0].astype(jnp.float32))
    return outs[None]                                     # (1, S, ntau_sub, F)


if __name__ == "__main__":
    in_features = 4
    params, ref_params = make_sith_params(in_features=in_features, tau_min=1.0,
                                          tau_max=50.0, k=4, alpha=1.0, g=1.0,
                                          ntau=30, T_every=1, dur=1.0)

    def max_rel_err(a, b):
        a = np.asarray(a)
        b = np.asarray(b)
        return float(np.max(np.abs(a - b)) / (np.max(np.abs(b)) + 1e-30))

    # 1) Small sequence: single block, single lane group.
    inp1 = jax.random.normal(jax.random.PRNGKey(0), (1, 8, in_features),
                             dtype=jnp.float32)
    out1 = jax.block_until_ready(sith_forward(inp1, params))
    ref1 = jax.block_until_ready(sith_reference(inp1, ref_params))
    assert out1.shape == (1, 8, 30, in_features), out1.shape
    assert max_rel_err(out1, ref1) < 2e-3, max_rel_err(out1, ref1)

    # 2) Longer sequence, default block size: one block, several lane groups
    #    (exercises the cross-group little-t carry inside a block).
    inp2 = jax.random.normal(jax.random.PRNGKey(1), (1, 200, in_features),
                             dtype=jnp.float32)
    out2 = jax.block_until_ready(sith_forward(inp2, params))
    ref2 = jax.block_until_ready(sith_reference(inp2, ref_params))
    assert out2.shape == (1, 200, 30, in_features), out2.shape
    assert max_rel_err(out2, ref2) < 2e-3, max_rel_err(out2, ref2)

    # 3) S > 2*B: multiple grid blocks (exercises the cross-block little-t carry
    #    persisted in VMEM scratch across grid steps).
    out3 = jax.block_until_ready(sith_forward(inp2, params, block_steps=64))
    assert out3.shape == (1, 200, 30, in_features), out3.shape
    assert max_rel_err(out3, ref2) < 2e-3, max_rel_err(out3, ref2)

    print("KERNEL_OK")
</pallas_src>

<mosaic_0001>
module attributes {stable_mosaic.version = 11 : i64} {
  func.func @sith_kernel(%arg0: i32, %arg1: memref<1x1x128xf32, #tpu.memory_space<vmem>>, %arg2: memref<5x40x128xf32, #tpu.memory_space<vmem>>, %arg3: memref<40x128xf32, #tpu.memory_space<vmem>>, %arg4: memref<32x40xf32, #tpu.memory_space<vmem>>, %arg5: memref<32x128xf32, #tpu.memory_space<vmem>>, %arg6: memref<40x128xf32, #tpu.memory_space<vmem>>, %arg7: memref<40x128xf32, #tpu.memory_space<vmem>>) attributes {dimension_semantics = [#tpu.dimension_semantics<arbitrary>], iteration_bounds = array<i64: 1>, scalar_prefetch = 0 : i64, scratch_operands = 2 : i64, tpu.core_type = #tpu.core_type<tc>, window_params = [{transform_indices = @transform_0, window_bounds = array<i64: 1, 1, 128>}, {pipeline_mode = #tpu.pipeline_mode<synchronous>, transform_indices = @transform_1, window_bounds = array<i64: 5, 40, 128>}, {pipeline_mode = #tpu.pipeline_mode<synchronous>, transform_indices = @transform_2, window_bounds = array<i64: 40, 128>}, {pipeline_mode = #tpu.pipeline_mode<synchronous>, transform_indices = @transform_3, window_bounds = array<i64: 32, 40>}, {transform_indices = @transform_4, window_bounds = array<i64: 32, 128>}]} {
    %c0_i32 = arith.constant 0 : i32
    %0 = arith.cmpi eq, %arg0, %c0_i32 : i32
    %1 = arith.extui %0 : i1 to i32
    %c0_i32_0 = arith.constant 0 : i32
    %2 = arith.cmpi ne, %1, %c0_i32_0 : i32
    scf.if %2 {
      %cst_28 = arith.constant 0.000000e+00 : f32
      %46 = vector.broadcast %cst_28 : f32 to vector<40x128xf32>
      %c0_29 = arith.constant 0 : index
      %c0_30 = arith.constant 0 : index
      %47 = vector.load %arg6[%c0_29, %c0_30] : memref<40x128xf32, #tpu.memory_space<vmem>>, vector<40x128xf32>
      tpu.vector_store %arg6[%c0_29, %c0_30], %46 {strides = array<i32>} : memref<40x128xf32, #tpu.memory_space<vmem>>, vector<40x128xf32>,
    } else {
    }
    %c0 = arith.constant 0 : index
    %c0_1 = arith.constant 0 : index
    %3 = vector.load %arg6[%c0, %c0_1] : memref<40x128xf32, #tpu.memory_space<vmem>>, vector<40x128xf32>
    %c0_i32_2 = arith.constant 0 : i32
    %c128_i32 = arith.constant 128 : i32
    %4 = arith.muli %c0_i32_2, %c128_i32 : i32
    %5 = tpu.assume_multiple %4, 128 : i32
    %c0_3 = arith.constant 0 : index
    %c0_4 = arith.constant 0 : index
    %6 = arith.index_cast %5 : i32 to index
    %7 = vector.load %arg1[%c0_3, %c0_4, %6] : memref<1x1x128xf32, #tpu.memory_space<vmem>>, vector<1x1x128xf32>
    %8 = vector.shape_cast %7 : vector<1x1x128xf32> to vector<1x128xf32>
    %9 = vector.broadcast %8 : vector<1x128xf32> to vector<40x128xf32>
    %10 = arith.addf %3, %9 : vector<40x128xf32>
    %c0_5 = arith.constant 0 : index
    %c0_6 = arith.constant 0 : index
    %c0_7 = arith.constant 0 : index
    %11 = vector.load %arg2[%c0_5, %c0_6, %c0_7] : memref<5x40x128xf32, #tpu.memory_space<vmem>>, vector<1x40x128xf32>
    %12 = vector.shape_cast %11 : vector<1x40x128xf32> to vector<40x128xf32>
    %c4_i32 = arith.constant 4 : i32
    %13 = tpu.dynamic_rotate %10 by %c4_i32 dim 1 : vector<40x128xf32>, i32 -> vector<40x128xf32>
    %14 = arith.mulf %12, %13 : vector<40x128xf32>
    %15 = arith.addf %10, %14 : vector<40x128xf32>
    %c1 = arith.constant 1 : index
    %c0_8 = arith.constant 0 : index
    %c0_9 = arith.constant 0 : index
    %16 = vector.load %arg2[%c1, %c0_8, %c0_9] : memref<5x40x128xf32, #tpu.memory_space<vmem>>, vector<1x40x128xf32>
    %17 = vector.shape_cast %16 : vector<1x40x128xf32> to vector<40x128xf32>
    %c8_i32 = arith.constant 8 : i32
    %18 = tpu.dynamic_rotate %15 by %c8_i32 dim 1 : vector<40x128xf32>, i32 -> vector<40x128xf32>
    %19 = arith.mulf %17, %18 : vector<40x128xf32>
    %20 = arith.addf %15, %19 : vector<40x128xf32>
    %c2 = arith.constant 2 : index
    %c0_10 = arith.constant 0 : index
    %c0_11 = arith.constant 0 : index
    %21 = vector.load %arg2[%c2, %c0_10, %c0_11] : memref<5x40x128xf32, #tpu.memory_space<vmem>>, vector<1x40x128xf32>
    %22 = vector.shape_cast %21 : vector<1x40x128xf32> to vector<40x128xf32>
    %c16_i32 = arith.constant 16 : i32
    %23 = tpu.dynamic_rotate %20 by %c16_i32 dim 1 : vector<40x128xf32>, i32 -> vector<40x128xf32>
    %24 = arith.mulf %22, %23 : vector<40x128xf32>
    %25 = arith.addf %20, %24 : vector<40x128xf32>
    %c3 = arith.constant 3 : index
    %c0_12 = arith.constant 0 : index
    %c0_13 = arith.constant 0 : index
    %26 = vector.load %arg2[%c3, %c0_12, %c0_13] : memref<5x40x128xf32, #tpu.memory_space<vmem>>, vector<1x40x128xf32>
    %27 = vector.shape_cast %26 : vector<1x40x128xf32> to vector<40x128xf32>
    %c32_i32 = arith.constant 32 : i32
    %28 = tpu.dynamic_rotate %25 by %c32_i32 dim 1 : vector<40x128xf32>, i32 -> vector<40x128xf32>
    %29 = arith.mulf %27, %28 : vector<40x128xf32>
    %30 = arith.addf %25, %29 : vector<40x128xf32>
    %c4 = arith.constant 4 : index
    %c0_14 = arith.constant 0 : index
    %c0_15 = arith.constant 0 : index
    %31 = vector.load %arg2[%c4, %c0_14, %c0_15] : memref<5x40x128xf32, #tpu.memory_space<vmem>>, vector<1x40x128xf32>
    %32 = vector.shape_cast %31 : vector<1x40x128xf32> to vector<40x128xf32>
    %c64_i32 = arith.constant 64 : i32
    %33 = tpu.dynamic_rotate %30 by %c64_i32 dim 1 : vector<40x128xf32>, i32 -> vector<40x128xf32>
    %34 = arith.mulf %32, %33 : vector<40x128xf32>
    %35 = arith.addf %30, %34 : vector<40x128xf32>
    %c0_16 = arith.constant 0 : index
    %36 = arith.index_cast %5 : i32 to index
    %37 = vector.load %arg7[%c0_16, %36] : memref<40x128xf32, #tpu.memory_space<vmem>>, vector<40x128xf32>
    tpu.vector_store %arg7[%c0_16, %36], %35 {strides = array<i32>} : memref<40x128xf32, #tpu.memory_space<vmem>>, vector<40x128xf32>,
    %c4_i32_17 = arith.constant 4 : i32
    %38 = tpu.dynamic_rotate %35 by %c4_i32_17 dim 1 : vector<40x128xf32>, i32 -> vector<40x128xf32>
    %c0_18 = arith.constant 0 : index
    %c0_19 = arith.constant 0 : index
    %39 = vector.load %arg3[%c0_18, %c0_19] : memref<40x128xf32, #tpu.memory_space<vmem>>, vector<40x128xf32>
    %40 = arith.mulf %39, %38 : vector<40x128xf32>
    %c1_i32 = arith.constant 1 : i32
    %c0_20 = arith.constant 0 : index
    %c0_21 = arith.constant 0 : index
    %41 = vector.load %arg6[%c0_20, %c0_21] : memref<40x128xf32, #tpu.memory_space<vmem>>, vector<40x128xf32>
    tpu.vector_store %arg6[%c0_20, %c0_21], %40 {strides = array<i32>} : memref<40x128xf32, #tpu.memory_space<vmem>>, vector<40x128xf32>,
    %c0_22 = arith.constant 0 : index
    %c0_23 = arith.constant 0 : index
    %42 = vector.load %arg4[%c0_22, %c0_23] : memref<32x40xf32, #tpu.memory_space<vmem>>, vector<32x40xf32>
    %c0_24 = arith.constant 0 : index
    %c0_25 = arith.constant 0 : index
    %43 = vector.load %arg7[%c0_24, %c0_25] : memref<40x128xf32, #tpu.memory_space<vmem>>, vector<40x128xf32>
    %cst = arith.constant dense<0.000000e+00> : vector<32x128xf32>
    %44 = tpu.matmul %42, %43, %cst {dimension_numbers = #tpu.dot_dimension_numbers<[1], [0], [0], [1], [0, 0, 1, 1], [], []>} : vector<32x40xf32>, vector<40x128xf32>, vector<32x128xf32> -> vector<32x128xf32>
    %c0_26 = arith.constant 0 : index
    %c0_27 = arith.constant 0 : index
    %45 = vector.load %arg5[%c0_26, %c0_27] : memref<32x128xf32, #tpu.memory_space<vmem>>, vector<32x128xf32>
    tpu.vector_store %arg5[%c0_26, %c0_27], %44 {strides = array<i32>} : memref<32x128xf32, #tpu.memory_space<vmem>>, vector<32x128xf32>,
    return
  }
  func.func @transform_0(%arg0: i32) -> (i32, i32, i32) {
    %c0_i32 = arith.constant 0 : i32
    %c0_i32_0 = arith.constant 0 : i32
    %c0_i32_1 = arith.constant 0 : i32
    return %arg0, %c0_i32, %c0_i32_0 : i32, i32, i32
  }
  func.func @transform_1(%arg0: i32) -> (i32, i32, i32) {
    %c0_i32 = arith.constant 0 : i32
    %c0_i32_0 = arith.constant 0 : i32
    %c0_i32_1 = arith.constant 0 : i32
    %c0_i32_2 = arith.constant 0 : i32
    return %c0_i32, %c0_i32_0, %c0_i32_1 : i32, i32, i32
  }
  func.func @transform_2(%arg0: i32) -> (i32, i32) {
    %c0_i32 = arith.constant 0 : i32
    %c0_i32_0 = arith.constant 0 : i32
    %c0_i32_1 = arith.constant 0 : i32
    return %c0_i32, %c0_i32_0 : i32, i32
  }
  func.func @transform_3(%arg0: i32) -> (i32, i32) {
    %c0_i32 = arith.constant 0 : i32
    %c0_i32_0 = arith.constant 0 : i32
    %c0_i32_1 = arith.constant 0 : i32
    return %c0_i32, %c0_i32_0 : i32, i32
  }
  func.func @transform_4(%arg0: i32) -> (i32, i32) {
    %c0_i32 = arith.constant 0 : i32
    %c0_i32_0 = arith.constant 0 : i32
    return %c0_i32, %arg0 : i32, i32
  }
}

</mosaic_0001>

<llo_original>
// kernel: tpu_custom_call.1
$region0: #{tpu_custom_call.1}
  #allocation0 [shape = 'u32[]', space=smem, size = 0x4, offset = 0x4, fixed_abs, tag = 'smem constant byte address 0x4 - core index']
  #allocation1 [shape = 'u32[72,128]{1,0:T(1,128)}', space=vmem, size = 0x9000, scoped, tag = 'internal scratch']
  #allocation2 [shape = 'f32[40,128]{1,0:T(8,128)}', space=vmem, size = 0x5000, scoped, tag = 'scratch operand']
  #allocation3 [shape = 'f32[40,128]{1,0:T(8,128)}', space=vmem, size = 0x5000, scoped, tag = 'scratch operand']
  %s0 = inlined_call_operand.hbm [shape: f32[1,1,128], index: 0, kind: input, shape index: {}]
  %s1 = inlined_call_operand.hbm [shape: f32[5,40,128], index: 1, kind: input, shape index: {}]
  %s2 = inlined_call_operand.hbm [shape: f32[40,128], index: 2, kind: input, shape index: {}]
  %s3 = inlined_call_operand.hbm [shape: f32[32,40], index: 3, kind: input, shape index: {}]
  %s4 = inlined_call_operand.hbm [shape: f32[32,128], index: 4, kind: output, shape index: {}]
  %s5 = sld [smem:[#allocation0]]
  $region46: #{tpu_custom_call.1} parent=0
    _
  %s7 = ssub.s32 1, %s5
  %s8 = scalar_select 0, %s7, %s5
  $region1: #{tpu_custom_call.1} parent=0
    #allocation4 [shape = 'u8[512]{0}', space=vmem, size = 0x400, scoped, tag = 'input window, operand 0, single buffered']
    #allocation5 [shape = 's32[1]{0}', space=sflag, size = 0x4, scoped, tag = 'scoped memory for tpu_custom_call.1']
    #allocation6 [shape = 's32[1]{0}', space=sflag, size = 0x4, scoped, tag = 'scoped memory for tpu_custom_call.1']
    #allocation7 [shape = 'u8[102400]{0}', space=vmem, size = 0x19000, scoped, tag = 'input window, operand 1, single buffered']
    #allocation8 [shape = 's32[1]{0}', space=sflag, size = 0x4, scoped, tag = 'scoped memory for tpu_custom_call.1']
    #allocation9 [shape = 'u8[20480]{0}', space=vmem, size = 0x5000, scoped, tag = 'input window, operand 2, single buffered']
    #allocation10 [shape = 'u8[16384]{0}', space=vmem, size = 0x4000, scoped, tag = 'input window, operand 3, single buffered']
    #allocation11 [shape = 's32[1]{0}', space=sflag, size = 0x4, scoped, tag = 'scoped memory for tpu_custom_call.1']
    #allocation12 [shape = 'u8[16384]{0}', space=vmem, size = 0x4000, scoped, tag = 'output window, operand 0, single buffered']
    %9 = vsyncpa [#allocation5], 0
    %10 = vsyncpa [#allocation8], 0
    %11 = vsyncpa [#allocation11], 0
    %12 = vsyncpa [#allocation6], 0
    // Predicated region
    $region2: #{tpu_custom_call.1} parent=1 // pred_check
      _
    $region3: #{tpu_custom_call.1} parent=1 // pred_check_branch
      %14 = sbr.rel (0) target = $region5
    $region4: #{tpu_custom_call.1} parent=1 // pred_region
      %16 = vsyncadd [#allocation5], 0
      %s18 = sshll.u32 %s0, 4
      %s19 = int_to_ptr.hbm [resolvable:$true] %s18
      %s20 = sshll.u32 [#allocation4], 4
      %s21 = int_to_ptr.vmem [resolvable:$true] %s20
      %23 = dma.hbm_to_vmem [thread:$0]  %s19, 16, %s21, [#allocation5]
    $region5: #{tpu_custom_call.1} parent=1 // pred_fallthru
      _
    // Predicated region
    $region6: #{tpu_custom_call.1} parent=1 // pred_check
      _
    $region7: #{tpu_custom_call.1} parent=1 // pred_check_branch
      %25 = sbr.rel (0) target = $region9
    $region8: #{tpu_custom_call.1} parent=1 // pred_region
      %27 = vsyncadd [#allocation8], 0
      %s28 = sshll.u32 %s1, 4
      %s29 = int_to_ptr.hbm [resolvable:$true] %s28
      %s30 = sshll.u32 [#allocation7], 4
      %s31 = int_to_ptr.vmem [resolvable:$true] %s30
      %36 = dma.hbm_to_vmem [thread:$0]  %s29, 3200, %s31, [#allocation8], 128, 128, 8
    $region9: #{tpu_custom_call.1} parent=1 // pred_fallthru
      _
    // Predicated region
    $region10: #{tpu_custom_call.1} parent=1 // pred_check
      _
    $region11: #{tpu_custom_call.1} parent=1 // pred_check_branch
      %38 = sbr.rel (0) target = $region13
    $region12: #{tpu_custom_call.1} parent=1 // pred_region
      %40 = vsyncadd [#allocation8], 0
      %s41 = sshll.u32 %s2, 4
      %s42 = int_to_ptr.hbm [resolvable:$true] %s41
      %s43 = sshll.u32 [#allocation9], 4
      %s44 = int_to_ptr.vmem [resolvable:$true] %s43
      %49 = dma.hbm_to_vmem [thread:$0]  %s42, 640, %s44, [#allocation8], 128, 128, 8
    $region13: #{tpu_custom_call.1} parent=1 // pred_fallthru
      _
    // Predicated region
    $region14: #{tpu_custom_call.1} parent=1 // pred_check
      _
    $region15: #{tpu_custom_call.1} parent=1 // pred_check_branch
      %51 = sbr.rel (0) target = $region17
    $region16: #{tpu_custom_call.1} parent=1 // pred_region
      %53 = vsyncadd [#allocation11], 0
      %s54 = sshll.u32 %s3, 4
      %s55 = int_to_ptr.hbm [resolvable:$true] %s54
      %s56 = sshll.u32 [#allocation10], 4
      %s57 = int_to_ptr.vmem [resolvable:$true] %s56
      %62 = dma.hbm_to_vmem [thread:$0]  %s55, 512, %s57, [#allocation11], 128, 128, 8
    $region17: #{tpu_custom_call.1} parent=1 // pred_fallthru
      _
    // Predicated region
    $region18: #{tpu_custom_call.1} parent=1 // pred_check
      _
    $region19: #{tpu_custom_call.1} parent=1 // pred_check_branch
      %64 = sbr.rel (0) target = $region21
    $region20: #{tpu_custom_call.1} parent=1 // pred_region
      %66 = dma.done [#allocation5], 16
    $region21: #{tpu_custom_call.1} parent=1 // pred_fallthru
      _
    // Predicated region
    $region22: #{tpu_custom_call.1} parent=1 // pred_check
      _
    $region23: #{tpu_custom_call.1} parent=1 // pred_check_branch
      %68 = sbr.rel (0) target = $region25
    $region24: #{tpu_custom_call.1} parent=1 // pred_region
      %70 = dma.done [#allocation8], 3200
    $region25: #{tpu_custom_call.1} parent=1 // pred_fallthru
      _
    // Predicated region
    $region26: #{tpu_custom_call.1} parent=1 // pred_check
      _
    $region27: #{tpu_custom_call.1} parent=1 // pred_check_branch
      %72 = sbr.rel (0) target = $region29
    $region28: #{tpu_custom_call.1} parent=1 // pred_region
      %74 = dma.done [#allocation8], 640
    $region29: #{tpu_custom_call.1} parent=1 // pred_fallthru
      _
    // Predicated region
    $region30: #{tpu_custom_call.1} parent=1 // pred_check
      _
    $region31: #{tpu_custom_call.1} parent=1 // pred_check_branch
      %76 = sbr.rel (0) target = $region33
    $region32: #{tpu_custom_call.1} parent=1 // pred_region
      %78 = dma.done [#allocation11], 512
    $region33: #{tpu_custom_call.1} parent=1 // pred_fallthru
      _
    %p79 = scmp.eq.s32.totalorder 0, 0
    // Predicated region
    $region34: #{tpu_custom_call.1} parent=1 // pred_check
      %p80 = pneg %p79
    $region35: #{tpu_custom_call.1} parent=1 // pred_check_branch
      %82 = sbr.rel (%p80) target = $region37
    $region36: #{tpu_custom_call.1} parent=1 // pred_region
      %83 = vst [vmem:[#allocation2] sm:$0xff] 0.0
      %84 = vst [vmem:[#allocation2 + $0x8] sm:$0xff] 0.0
      %85 = vst [vmem:[#allocation2 + $0x10] sm:$0xff] 0.0
      %86 = vst [vmem:[#allocation2 + $0x18] sm:$0xff] 0.0
      %87 = vst [vmem:[#allocation2 + $0x20] sm:$0xff] 0.0
    $region37: #{tpu_custom_call.1} parent=1 // pred_fallthru
      _
    %v88 = vld [vmem:[#allocation2] sm:$0xff]
    %v89 = vld [vmem:[#allocation2 + $0x8] sm:$0xff]
    %v90 = vld [vmem:[#allocation2 + $0x10] sm:$0xff]
    %v91 = vld [vmem:[#allocation2 + $0x18] sm:$0xff]
    %v92 = vld [vmem:[#allocation2 + $0x20] sm:$0xff]
    %v93 = vld [vmem:[#allocation4] sm:$0x1]
    %v95 = vperm.slane %v93, 0
    %v97 = vadd.f32 %v88, %v95
    %v98 = vadd.f32 %v89, %v95
    %v99 = vadd.f32 %v90, %v95
    %v100 = vadd.f32 %v91, %v95
    %v101 = vadd.f32 %v92, %v95
    %v102 = vld [vmem:[#allocation7] sm:$0xff]
    %v103 = vld [vmem:[#allocation7 + $0x8] sm:$0xff]
    %v104 = vld [vmem:[#allocation7 + $0x10] sm:$0xff]
    %v105 = vld [vmem:[#allocation7 + $0x18] sm:$0xff]
    %v106 = vld [vmem:[#allocation7 + $0x20] sm:$0xff]
    %107 = vrot.lane.b32.xlu0 %v97, 4
    %v108 = vpop.permute.xlu0 %107
    %109 = vrot.lane.b32.xlu0 %v98, 4
    %v110 = vpop.permute.xlu0 %109
    %111 = vrot.lane.b32.xlu0 %v99, 4
    %v112 = vpop.permute.xlu0 %111
    %113 = vrot.lane.b32.xlu0 %v100, 4
    %v114 = vpop.permute.xlu0 %113
    %115 = vrot.lane.b32.xlu0 %v101, 4
    %v116 = vpop.permute.xlu0 %115
    %v117 = vmul.f32 %v102, %v108
    %v118 = vmul.f32 %v103, %v110
    %v119 = vmul.f32 %v104, %v112
    %v120 = vmul.f32 %v105, %v114
    %v121 = vmul.f32 %v106, %v116
    %v122 = vadd.f32 %v97, %v117
    %v123 = vadd.f32 %v98, %v118
    %v124 = vadd.f32 %v99, %v119
    %v125 = vadd.f32 %v100, %v120
    %v126 = vadd.f32 %v101, %v121
    %s127 = scalar_lea.vmem [#allocation7], 40
    %v128 = vld [vmem:[%s127] sm:$0xff]
    %v129 = vld [vmem:[%s127 + $0x8] sm:$0xff]
    %v130 = vld [vmem:[%s127 + $0x10] sm:$0xff]
    %v131 = vld [vmem:[%s127 + $0x18] sm:$0xff]
    %v132 = vld [vmem:[%s127 + $0x20] sm:$0xff]
    %133 = vrot.lane.b32.xlu0 %v122, 8
    %v134 = vpop.permute.xlu0 %133
    %135 = vrot.lane.b32.xlu0 %v123, 8
    %v136 = vpop.permute.xlu0 %135
    %137 = vrot.lane.b32.xlu0 %v124, 8
    %v138 = vpop.permute.xlu0 %137
    %139 = vrot.lane.b32.xlu0 %v125, 8
    %v140 = vpop.permute.xlu0 %139
    %141 = vrot.lane.b32.xlu0 %v126, 8
    %v142 = vpop.permute.xlu0 %141
    %v143 = vmul.f32 %v128, %v134
    %v144 = vmul.f32 %v129, %v136
    %v145 = vmul.f32 %v130, %v138
    %v146 = vmul.f32 %v131, %v140
    %v147 = vmul.f32 %v132, %v142
    %v148 = vadd.f32 %v122, %v143
    %v149 = vadd.f32 %v123, %v144
    %v150 = vadd.f32 %v124, %v145
    %v151 = vadd.f32 %v125, %v146
    %v152 = vadd.f32 %v126, %v147
    %s153 = scalar_lea.vmem [#allocation7], 80
    %v154 = vld [vmem:[%s153] sm:$0xff]
    %v155 = vld [vmem:[%s153 + $0x8] sm:$0xff]
    %v156 = vld [vmem:[%s153 + $0x10] sm:$0xff]
    %v157 = vld [vmem:[%s153 + $0x18] sm:$0xff]
    %v158 = vld [vmem:[%s153 + $0x20] sm:$0xff]
    %159 = vrot.lane.b32.xlu0 %v148, 16
    %v160 = vpop.permute.xlu0 %159
    %161 = vrot.lane.b32.xlu0 %v149, 16
    %v162 = vpop.permute.xlu0 %161
    %163 = vrot.lane.b32.xlu0 %v150, 16
    %v164 = vpop.permute.xlu0 %163
    %165 = vrot.lane.b32.xlu0 %v151, 16
    %v166 = vpop.permute.xlu0 %165
    %167 = vrot.lane.b32.xlu0 %v152, 16
    %v168 = vpop.permute.xlu0 %167
    %v169 = vmul.f32 %v154, %v160
    %v170 = vmul.f32 %v155, %v162
    %v171 = vmul.f32 %v156, %v164
    %v172 = vmul.f32 %v157, %v166
    %v173 = vmul.f32 %v158, %v168
    %v174 = vadd.f32 %v148, %v169
    %v175 = vadd.f32 %v149, %v170
    %v176 = vadd.f32 %v150, %v171
    %v177 = vadd.f32 %v151, %v172
    %v178 = vadd.f32 %v152, %v173
    %s179 = scalar_lea.vmem [#allocation7], 120
    %v180 = vld [vmem:[%s179] sm:$0xff]
    %v181 = vld [vmem:[%s179 + $0x8] sm:$0xff]
    %v182 = vld [vmem:[%s179 + $0x10] sm:$0xff]
    %v183 = vld [vmem:[%s179 + $0x18] sm:$0xff]
    %v184 = vld [vmem:[%s179 + $0x20] sm:$0xff]
    %185 = vrot.lane.b32.xlu0 %v174, 32
    %v186 = vpop.permute.xlu0 %185
    %187 = vrot.lane.b32.xlu0 %v175, 32
    %v188 = vpop.permute.xlu0 %187
    %189 = vrot.lane.b32.xlu0 %v176, 32
    %v190 = vpop.permute.xlu0 %189
    %191 = vrot.lane.b32.xlu0 %v177, 32
    %v192 = vpop.permute.xlu0 %191
    %193 = vrot.lane.b32.xlu0 %v178, 32
    %v194 = vpop.permute.xlu0 %193
    %v195 = vmul.f32 %v180, %v186
    %v196 = vmul.f32 %v181, %v188
    %v197 = vmul.f32 %v182, %v190
    %v198 = vmul.f32 %v183, %v192
    %v199 = vmul.f32 %v184, %v194
    %v200 = vadd.f32 %v174, %v195
    %v201 = vadd.f32 %v175, %v196
    %v202 = vadd.f32 %v176, %v197
    %v203 = vadd.f32 %v177, %v198
    %v204 = vadd.f32 %v178, %v199
    %s205 = scalar_lea.vmem [#allocation7], 160
    %v206 = vld [vmem:[%s205] sm:$0xff]
    %v207 = vld [vmem:[%s205 + $0x8] sm:$0xff]
    %v208 = vld [vmem:[%s205 + $0x10] sm:$0xff]
    %v209 = vld [vmem:[%s205 + $0x18] sm:$0xff]
    %v210 = vld [vmem:[%s205 + $0x20] sm:$0xff]
    %211 = vrot.lane.b32.xlu0 %v200, 64
    %v212 = vpop.permute.xlu0 %211
    %213 = vrot.lane.b32.xlu0 %v201, 64
    %v214 = vpop.permute.xlu0 %213
    %215 = vrot.lane.b32.xlu0 %v202, 64
    %v216 = vpop.permute.xlu0 %215
    %217 = vrot.lane.b32.xlu0 %v203, 64
    %v218 = vpop.permute.xlu0 %217
    %219 = vrot.lane.b32.xlu0 %v204, 64
    %v220 = vpop.permute.xlu0 %219
    %v221 = vmul.f32 %v206, %v212
    %v222 = vmul.f32 %v207, %v214
    %v223 = vmul.f32 %v208, %v216
    %v224 = vmul.f32 %v209, %v218
    %v225 = vmul.f32 %v210, %v220
    %v226 = vadd.f32 %v200, %v221
    %v227 = vadd.f32 %v201, %v222
    %v228 = vadd.f32 %v202, %v223
    %v229 = vadd.f32 %v203, %v224
    %v230 = vadd.f32 %v204, %v225
    %231 = vst [vmem:[#allocation3] sm:$0xff] %v226
    %232 = vst [vmem:[#allocation3 + $0x8] sm:$0xff] %v227
    %233 = vst [vmem:[#allocation3 + $0x10] sm:$0xff] %v228
    %234 = vst [vmem:[#allocation3 + $0x18] sm:$0xff] %v229
    %235 = vst [vmem:[#allocation3 + $0x20] sm:$0xff] %v230
    %236 = vrot.lane.b32.xlu0 %v226, 4
    %v237 = vpop.permute.xlu0 %236
    %238 = vrot.lane.b32.xlu0 %v227, 4
    %v239 = vpop.permute.xlu0 %238
    %240 = vrot.lane.b32.xlu0 %v228, 4
    %v241 = vpop.permute.xlu0 %240
    %242 = vrot.lane.b32.xlu0 %v229, 4
    %v243 = vpop.permute.xlu0 %242
    %244 = vrot.lane.b32.xlu0 %v230, 4
    %v245 = vpop.permute.xlu0 %244
    %v246 = vld [vmem:[#allocation9] sm:$0xff]
    %v247 = vld [vmem:[#allocation9 + $0x8] sm:$0xff]
    %v248 = vld [vmem:[#allocation9 + $0x10] sm:$0xff]
    %v249 = vld [vmem:[#allocation9 + $0x18] sm:$0xff]
    %v250 = vld [vmem:[#allocation9 + $0x20] sm:$0xff]
    %v251 = vmul.f32 %v246, %v237
    %v252 = vmul.f32 %v247, %v239
    %v253 = vmul.f32 %v248, %v241
    %v254 = vmul.f32 %v249, %v243
    %v255 = vmul.f32 %v250, %v245
    %256 = vst [vmem:[#allocation2] sm:$0xff] %v251
    %257 = vst [vmem:[#allocation2 + $0x8] sm:$0xff] %v252
    %258 = vst [vmem:[#allocation2 + $0x10] sm:$0xff] %v253
    %259 = vst [vmem:[#allocation2 + $0x18] sm:$0xff] %v254
    %260 = vst [vmem:[#allocation2 + $0x20] sm:$0xff] %v255
    %v261 = vld [vmem:[#allocation10] sm:$0xff]
    %v262 = vld [vmem:[#allocation10 + $0x8] sm:$0xff]
    %v263 = vld [vmem:[#allocation10 + $0x10] sm:$0xff]
    %v264 = vld [vmem:[#allocation10 + $0x18] sm:$0xff]
    %v265 = vld [vmem:[#allocation3] sm:$0xff]
    %v266 = vld [vmem:[#allocation3 + $0x8] sm:$0xff]
    %v267 = vld [vmem:[#allocation3 + $0x10] sm:$0xff]
    %v268 = vld [vmem:[#allocation3 + $0x18] sm:$0xff]
    %v269 = vld [vmem:[#allocation3 + $0x20] sm:$0xff]
    %vm270 = vcmask 326656
    %v272 = vsel %vm270, %v261, 0
    %v275 = vsel %vm270, %v262, 0
    %v278 = vsel %vm270, %v263, 0
    %v281 = vsel %vm270, %v264, 0
    %283 = vmatpush.msra.mxu0 0.0
    %284 = vmatpush.msra.mxu0 0.0
    %285 = vmatpush.msra.mxu0 0.0
    %286 = vmatpush.msra.mxu0 0.0
    %287 = vmatpush.msra.mxu0 0.0
    %288 = vmatpush.msra.mxu0 0.0
    %289 = vmatpush.msra.mxu0 0.0
    %290 = vmatpush.msra.mxu0 0.0
    %291 = vmatpush.msra.mxu0 0.0
    %292 = vmatpush.msra.mxu0 0.0
    %293 = vmatpush.msra.mxu0 0.0
    %294 = vmatpush.msra.mxu0 %v269
    %295 = vmatpush.msra.mxu0 %v268
    %296 = vmatpush.msra.mxu0 %v267
    %297 = vmatpush.msra.mxu0 %v266
    %298 = vmatpush.msra.mxu0 %v265
    %299 = vmatmul.f32.gmra.mxu0 %v272
    %v300 = vpop.f32.mrf.mxu0
    %v301 = vadd.f32 0.0, %v300
    %302 = vmatmul.f32.gmra.mxu0 %v275
    %v303 = vpop.f32.mrf.mxu0
    %v304 = vadd.f32 0.0, %v303
    %305 = vmatmul.f32.gmra.mxu0 %v278
    %v306 = vpop.f32.mrf.mxu0
    %v307 = vadd.f32 0.0, %v306
    %308 = vmatmul.f32.gmra.mxu0 %v281
    %v309 = vpop.f32.mrf.mxu0
    %v310 = vadd.f32 0.0, %v309
    %311 = vdwg.mxu0
    %312 = vst [vmem:[#allocation12] sm:$0xff] %v301
    %313 = vst [vmem:[#allocation12 + $0x8] sm:$0xff] %v304
    %314 = vst [vmem:[#allocation12 + $0x10] sm:$0xff] %v307
    %315 = vst [vmem:[#allocation12 + $0x18] sm:$0xff] %v310
    // Predicated region
    $region38: #{tpu_custom_call.1} parent=1 // pred_check
      _
    $region39: #{tpu_custom_call.1} parent=1 // pred_check_branch
      %317 = sbr.rel (0) target = $region41
    $region40: #{tpu_custom_call.1} parent=1 // pred_region
      %319 = vsyncadd [#allocation6], 0
      %s320 = sshll.u32 [#allocation12], 4
      %s321 = int_to_ptr.vmem [resolvable:$true] %s320
      %s322 = sshll.u32 %s4, 4
      %s323 = int_to_ptr.hbm [resolvable:$true] %s322
      %328 = dma.vmem_to_hbm [thread:$0]  %s321, 512, %s323, [#allocation6], 128, 128, 8
    $region41: #{tpu_custom_call.1} parent=1 // pred_fallthru
      _
    // Predicated region
    $region42: #{tpu_custom_call.1} parent=1 // pred_check
      _
    $region43: #{tpu_custom_call.1} parent=1 // pred_check_branch
      %330 = sbr.rel (0) target = $region45
    $region44: #{tpu_custom_call.1} parent=1 // pred_region
      %332 = dma.done [#allocation6], 512
    $region45: #{tpu_custom_call.1} parent=1 // pred_fallthru
      _
    %333 = vsyncpa [#allocation5], 1
    %334 = vsyncpa [#allocation8], 1
    %335 = vsyncpa [#allocation11], 1
    %336 = vsyncpa [#allocation6], 1

</llo_original>
